<compile_context>
chip_gen: v7x
topology: tpu7x:2x2x1
jax: 0.10.0
libtpu: 0.0.40
codegen_flags: <defaults>
</compile_context>

<pallas_src>
import functools
import math

import jax
import jax.numpy as jnp
from jax.experimental import pallas as pl
from jax.experimental.pallas import tpu as pltpu


def _head_kernel(x_ref, scale_ref, w_ref, prev_ref, o_ref, *, eps):
    # ---- RMSNorm (promote to f32, as in the torch reference) ----
    x_f32 = x_ref[...].astype(jnp.float32)                       # [TN, D]
    mean_sq = jnp.mean(x_f32 * x_f32, axis=-1, keepdims=True)    # [TN, 1]
    scale = scale_ref[...].astype(jnp.float32)                   # [1, D]
    scale = scale * jax.lax.rsqrt(mean_sq + eps)                 # [TN, D] (broadcast)
    # Reuse x_f32 (no second load/cast of the tile). For bf16 inputs this keeps the
    # multiply in f32 before the down-cast below -- slightly higher precision than the
    # torch reference's `x * scale.to(x.dtype)`, identical for f32 inputs.
    x_norm = x_f32 * scale                                       # [TN, D] f32

    # ---- Linear projection (MXU): feed weight in its native dtype, accumulate in f32 ----
    w = w_ref[...]
    if w.dtype != jnp.float32:
        x_norm = x_norm.astype(w.dtype)                          # bf16 x bf16 -> f32 acc on MXU
    logits = jnp.dot(x_norm, w, preferred_element_type=jnp.float32)  # [TN, TV]

    # ---- logaddexp(logits, prev) ----  (EUP work: exp + log1p per output element)
    prev = prev_ref[...].astype(jnp.float32)                     # [TN, TV]
    o_ref[...] = jnp.logaddexp(logits, prev).astype(o_ref.dtype)


def _round_up(n, m):
    return ((n + m - 1) // m) * m


def head_forward(x, out, scale, w, *, eps=1e-6, row_tile=256, vocab_tile=2048,
                 vmem_limit_bytes=64 * 1024 * 1024):
    """x: [B, S, D], out: [B, S, V], scale: [D], w: [D, V] -> [B, S, V].

    row_tile:   rows per grid step (multiple of 8).  256 fills the MXU M dim on v6e/v7x;
                use 128 on v5e or to get >=2 row tiles (megacore) for small N.
    vocab_tile: lanes per grid step (multiple of 128).  Pick ~1024-2048 on v7x
                (64 MiB VMEM); larger is fine on v5e/v6e (128 MiB VMEM).
    """
    B, S, D = x.shape
    V = w.shape[1]
    assert out.shape == (B, S, V)
    assert w.shape[0] == D and scale.shape == (D,)

    N = B * S
    x2 = x.reshape(N, D)
    out2 = out.reshape(N, V)
    scale2 = scale.reshape(1, D)

    # Tile sizes: sublane/lane aligned, capped near the actual extents (no wrapper pad).
    TN = min(row_tile, _round_up(N, 8))
    TV = min(vocab_tile, _round_up(V, 128))
    grid = (pl.cdiv(V, TV), pl.cdiv(N, TN))  # vocab OUTER, rows INNER -> weight tile resident

    kernel = functools.partial(_head_kernel, eps=eps)

    def _isz(a):
        return jnp.dtype(a.dtype).itemsize

    cost = pl.CostEstimate(
        flops=2 * N * D * V,
        transcendentals=2 * N * V,
        bytes_accessed=(N * D * _isz(x) + D * V * _isz(w) + 2 * N * V * _isz(out)),
    )

    result = pl.pallas_call(
        kernel,
        out_shape=jax.ShapeDtypeStruct((N, V), out.dtype),
        grid_spec=pltpu.PrefetchScalarGridSpec(
            num_scalar_prefetch=0,
            grid=grid,
            in_specs=[
                pl.BlockSpec((TN, D), lambda j, i: (i, 0)),    # x row tile
                pl.BlockSpec((1, D), lambda j, i: (0, 0)),     # scale (broadcast)
                pl.BlockSpec((D, TV), lambda j, i: (0, j)),    # weight column tile (resident over rows)
                pl.BlockSpec((TN, TV), lambda j, i: (i, j)),   # previous `out`
            ],
            out_specs=pl.BlockSpec((TN, TV), lambda j, i: (i, j)),
        ),
        compiler_params=pltpu.CompilerParams(
            dimension_semantics=("parallel", "parallel"),
            vmem_limit_bytes=vmem_limit_bytes,
        ),
        cost_estimate=cost,
        input_output_aliases={3: 0},   # overwrite the prev `out` buffer in place
    )(x2, scale2, w, out2)

    return result.reshape(B, S, V)


def head_reference(x, out, scale, w, eps=1e-6):
    """Pure-JAX reference matching the PyTorch forward."""
    x32 = x.astype(jnp.float32)
    mean_sq = jnp.mean(x32 ** 2, axis=-1, keepdims=True)
    s = scale.astype(jnp.float32) * jax.lax.rsqrt(mean_sq + eps)
    xn = x * s.astype(x.dtype)
    logits = xn @ w
    return jnp.logaddexp(logits, out)


if __name__ == "__main__":
    key = jax.random.PRNGKey(0)
    k1, k2, k3, k4 = jax.random.split(key, 4)

    B, S, D, V = 2, 8, 32, 128   # small shapes consistent with Head(dim=32, vocab_size=128)

    x = jax.random.normal(k1, (B, S, D), dtype=jnp.float32)
    out_prev = jax.random.normal(k2, (B, S, V), dtype=jnp.float32)

    # Parameters (deterministic init): RMSNorm scale = ones, Linear weight ~ U(-1/sqrt(D), 1/sqrt(D)).
    scale = jnp.ones((D,), dtype=jnp.float32)
    bound = 1.0 / math.sqrt(D)
    w_pt = jax.random.uniform(k3, (V, D), minval=-bound, maxval=bound, dtype=jnp.float32)
    w = w_pt.T  # [D, V] for the kernel layout

    # Compute the reference before the kernel (the kernel aliases / overwrites `out`'s buffer).
    y_ref = head_reference(x, out_prev, scale, w)

    y = head_forward(x, out_prev, scale, w)
    y = jax.block_until_ready(y)

    assert y.shape == (B, S, V)
    assert jnp.allclose(y, y_ref, atol=1e-5, rtol=1e-5), "mismatch vs reference"

    print("KERNEL_OK")
</pallas_src>

<mosaic_0001>
module attributes {stable_mosaic.version = 11 : i64} {
  func.func @_head_kernel(%arg0: i32, %arg1: i32, %arg2: memref<16x32xf32, #tpu.memory_space<vmem>>, %arg3: memref<1x32xf32, #tpu.memory_space<vmem>>, %arg4: memref<32x128xf32, #tpu.memory_space<vmem>>, %arg5: memref<16x128xf32, #tpu.memory_space<vmem>>, %arg6: memref<16x128xf32, #tpu.memory_space<vmem>>) attributes {dimension_semantics = [#tpu.dimension_semantics<parallel>, #tpu.dimension_semantics<parallel>], iteration_bounds = array<i64: 1, 1>, scalar_prefetch = 0 : i64, scratch_operands = 0 : i64, tpu.core_type = #tpu.core_type<tc>, window_params = [{transform_indices = @transform_0, window_bounds = array<i64: 16, 32>}, {pipeline_mode = #tpu.pipeline_mode<synchronous>, transform_indices = @transform_1, window_bounds = array<i64: 1, 32>}, {transform_indices = @transform_2, window_bounds = array<i64: 32, 128>}, {transform_indices = @transform_3, window_bounds = array<i64: 16, 128>}, {transform_indices = @transform_4, window_bounds = array<i64: 16, 128>}]} {
    %c0 = arith.constant 0 : index
    %c0_0 = arith.constant 0 : index
    %0 = vector.load %arg2[%c0, %c0_0] : memref<16x32xf32, #tpu.memory_space<vmem>>, vector<16x32xf32>
    %1 = arith.mulf %0, %0 : vector<16x32xf32>
    %cst = arith.constant dense<0.000000e+00> : vector<16xf32>
    %2 = vector.multi_reduction <add>, %1, %cst [1] : vector<16x32xf32> to vector<16xf32>
    %3 = vector.shape_cast %2 : vector<16xf32> to vector<16x1xf32>
    %cst_1 = arith.constant 3.200000e+01 : f32
    %4 = vector.broadcast %cst_1 : f32 to vector<16x1xf32>
    %5 = arith.divf %3, %4 : vector<16x1xf32>
    %c0_2 = arith.constant 0 : index
    %c0_3 = arith.constant 0 : index
    %6 = vector.load %arg3[%c0_2, %c0_3] : memref<1x32xf32, #tpu.memory_space<vmem>>, vector<1x32xf32>
    %cst_4 = arith.constant 9.99999997E-7 : f32
    %7 = vector.broadcast %cst_4 : f32 to vector<16x1xf32>
    %8 = arith.addf %5, %7 : vector<16x1xf32>
    %9 = math.rsqrt %8 : vector<16x1xf32>
    %10 = vector.broadcast %6 : vector<1x32xf32> to vector<16x32xf32>
    %11 = vector.broadcast %9 : vector<16x1xf32> to vector<16x32xf32>
    %12 = arith.mulf %10, %11 : vector<16x32xf32>
    %13 = arith.mulf %0, %12 : vector<16x32xf32>
    %c0_5 = arith.constant 0 : index
    %c0_6 = arith.constant 0 : index
    %14 = vector.load %arg4[%c0_5, %c0_6] : memref<32x128xf32, #tpu.memory_space<vmem>>, vector<32x128xf32>
    %cst_7 = arith.constant dense<0.000000e+00> : vector<16x128xf32>
    %15 = tpu.matmul %13, %14, %cst_7 {dimension_numbers = #tpu.dot_dimension_numbers<[1], [0], [0], [1], [0, 0, 1, 1], [], []>} : vector<16x32xf32>, vector<32x128xf32>, vector<16x128xf32> -> vector<16x128xf32>
    %c0_8 = arith.constant 0 : index
    %c0_9 = arith.constant 0 : index
    %16 = vector.load %arg5[%c0_8, %c0_9] : memref<16x128xf32, #tpu.memory_space<vmem>>, vector<16x128xf32>
    %17 = arith.maximumf %15, %16 : vector<16x128xf32>
    %18 = arith.subf %15, %16 : vector<16x128xf32>
    %19 = arith.cmpf one, %18, %18 : vector<16x128xf32>
    %20 = arith.addf %15, %16 : vector<16x128xf32>
    %21 = math.absf %18 : vector<16x128xf32>
    %cst_10 = arith.constant 0.000000e+00 : f32
    %22 = vector.broadcast %cst_10 : f32 to vector<16x128xf32>
    %23 = arith.subf %22, %21 : vector<16x128xf32>
    %24 = math.exp %23 : vector<16x128xf32>
    %25 = math.log1p %24 : vector<16x128xf32>
    %26 = arith.addf %17, %25 : vector<16x128xf32>
    %27 = arith.select %19, %20, %26 : vector<16x128xi1>, vector<16x128xf32>
    %c0_11 = arith.constant 0 : index
    %c0_12 = arith.constant 0 : index
    %28 = vector.load %arg6[%c0_11, %c0_12] : memref<16x128xf32, #tpu.memory_space<vmem>>, vector<16x128xf32>
    tpu.vector_store %arg6[%c0_11, %c0_12], %27 {strides = array<i32>} : memref<16x128xf32, #tpu.memory_space<vmem>>, vector<16x128xf32>,
    return
  }
  func.func @transform_0(%arg0: i32, %arg1: i32) -> (i32, i32) {
    %c0_i32 = arith.constant 0 : i32
    %c0_i32_0 = arith.constant 0 : i32
    return %arg1, %c0_i32 : i32, i32
  }
  func.func @transform_1(%arg0: i32, %arg1: i32) -> (i32, i32) {
    %c0_i32 = arith.constant 0 : i32
    %c0_i32_0 = arith.constant 0 : i32
    %c0_i32_1 = arith.constant 0 : i32
    return %c0_i32, %c0_i32_0 : i32, i32
  }
  func.func @transform_2(%arg0: i32, %arg1: i32) -> (i32, i32) {
    %c0_i32 = arith.constant 0 : i32
    %c0_i32_0 = arith.constant 0 : i32
    return %c0_i32, %arg0 : i32, i32
  }
  func.func @transform_3(%arg0: i32, %arg1: i32) -> (i32, i32) {
    %c0_i32 = arith.constant 0 : i32
    return %arg1, %arg0 : i32, i32
  }
  func.func @transform_4(%arg0: i32, %arg1: i32) -> (i32, i32) {
    %c0_i32 = arith.constant 0 : i32
    return %arg1, %arg0 : i32, i32
  }
}

</mosaic_0001>

<llo_original>
// kernel: tpu_custom_call.1
$region0: #{tpu_custom_call.1}
  #allocation0 [shape = 'u32[]', space=smem, size = 0x4, offset = 0x4, fixed_abs, tag = 'smem constant byte address 0x4 - core index']
  #allocation1 [shape = 'u32[144,128]{1,0:T(1,128)}', space=vmem, size = 0x12000, scoped, tag = 'internal scratch']
  %s0 = inlined_call_operand.hbm [shape: f32[16,32], index: 0, kind: input, shape index: {}]
  %s1 = inlined_call_operand.hbm [shape: f32[1,32], index: 1, kind: input, shape index: {}]
  %s2 = inlined_call_operand.hbm [shape: f32[32,128], index: 2, kind: input, shape index: {}]
  %s3 = inlined_call_operand.hbm [shape: f32[16,128], index: 3, kind: input, shape index: {}, may-alias: {3,4}]
  %s4 = inlined_call_operand.hbm [shape: f32[16,128], index: 4, kind: output, shape index: {}, may-alias: {3,4}]
  %s5 = sld [smem:[#allocation0]]
  $region42: #{tpu_custom_call.1} parent=0
    _
  %s7 = ssub.s32 1, %s5
  %s8 = scalar_select 0, %s7, %s5
  $region1: #{tpu_custom_call.1} parent=0
    #allocation2 [shape = 'u8[8192]{0}', space=vmem, size = 0x2000, scoped, tag = 'input window, operand 0, single buffered']
    #allocation3 [shape = 's32[1]{0}', space=sflag, size = 0x4, scoped, tag = 'scoped memory for tpu_custom_call.1']
    #allocation4 [shape = 's32[1]{0}', space=sflag, size = 0x4, scoped, tag = 'scoped memory for tpu_custom_call.1']
    #allocation5 [shape = 'u8[512]{0}', space=vmem, size = 0x400, scoped, tag = 'input window, operand 1, single buffered']
    #allocation6 [shape = 's32[1]{0}', space=sflag, size = 0x4, scoped, tag = 'scoped memory for tpu_custom_call.1']
    #allocation7 [shape = 'u8[16384]{0}', space=vmem, size = 0x4000, scoped, tag = 'input window, operand 2, single buffered']
    #allocation8 [shape = 'u8[8192]{0}', space=vmem, size = 0x2000, scoped, tag = 'input window, operand 3, single buffered']
    #allocation9 [shape = 's32[1]{0}', space=sflag, size = 0x4, scoped, tag = 'scoped memory for tpu_custom_call.1']
    #allocation10 [shape = 'u8[8192]{0}', space=vmem, size = 0x2000, scoped, tag = 'output window, operand 0, single buffered']
    %9 = vsyncpa [#allocation3], 0
    %10 = vsyncpa [#allocation6], 0
    %11 = vsyncpa [#allocation9], 0
    %12 = vsyncpa [#allocation4], 0
    // Predicated region
    $region2: #{tpu_custom_call.1} parent=1 // pred_check
      _
    $region3: #{tpu_custom_call.1} parent=1 // pred_check_branch
      %14 = sbr.rel (0) target = $region5
    $region4: #{tpu_custom_call.1} parent=1 // pred_region
      %s16 = ssub.s32 256, 256
      %17 = vsyncadd [#allocation3], %s16
      %s18 = sshll.u32 [#allocation2], 4
      %s19 = int_to_ptr.vmem [resolvable:$true] %s18
      %24 = dma.hbm_to_vmem [thread:$0]  %s0, 256, %s19, [#allocation3], 128, 128, 8
    $region5: #{tpu_custom_call.1} parent=1 // pred_fallthru
      _
    // Predicated region
    $region6: #{tpu_custom_call.1} parent=1 // pred_check
      _
    $region7: #{tpu_custom_call.1} parent=1 // pred_check_branch
      %26 = sbr.rel (0) target = $region9
    $region8: #{tpu_custom_call.1} parent=1 // pred_region
      %s28 = ssub.s32 16, 16
      %29 = vsyncadd [#allocation6], %s28
      %s31 = sshll.u32 [#allocation5], 4
      %s32 = int_to_ptr.vmem [resolvable:$true] %s31
      %34 = dma.hbm_to_vmem [thread:$0]  %s1, 16, %s32, [#allocation6]
    $region9: #{tpu_custom_call.1} parent=1 // pred_fallthru
      _
    // Predicated region
    $region10: #{tpu_custom_call.1} parent=1 // pred_check
      _
    $region11: #{tpu_custom_call.1} parent=1 // pred_check_branch
      %36 = sbr.rel (0) target = $region13
    $region12: #{tpu_custom_call.1} parent=1 // pred_region
      %s38 = ssub.s32 512, 512
      %39 = vsyncadd [#allocation6], %s38
      %s40 = sshll.u32 [#allocation7], 4
      %s41 = int_to_ptr.vmem [resolvable:$true] %s40
      %46 = dma.hbm_to_vmem [thread:$0]  %s2, 512, %s41, [#allocation6], 128, 128, 8
    $region13: #{tpu_custom_call.1} parent=1 // pred_fallthru
      _
    // Predicated region
    $region14: #{tpu_custom_call.1} parent=1 // pred_check
      _
    $region15: #{tpu_custom_call.1} parent=1 // pred_check_branch
      %48 = sbr.rel (0) target = $region17
    $region16: #{tpu_custom_call.1} parent=1 // pred_region
      %s50 = ssub.s32 256, 256
      %51 = vsyncadd [#allocation9], %s50
      %s52 = sshll.u32 [#allocation8], 4
      %s53 = int_to_ptr.vmem [resolvable:$true] %s52
      %58 = dma.hbm_to_vmem [thread:$0]  %s3, 256, %s53, [#allocation9], 128, 128, 8
    $region17: #{tpu_custom_call.1} parent=1 // pred_fallthru
      _
    // Predicated region
    $region18: #{tpu_custom_call.1} parent=1 // pred_check
      _
    $region19: #{tpu_custom_call.1} parent=1 // pred_check_branch
      %60 = sbr.rel (0) target = $region21
    $region20: #{tpu_custom_call.1} parent=1 // pred_region
      %61 = dma.done [#allocation3], 256
    $region21: #{tpu_custom_call.1} parent=1 // pred_fallthru
      _
    // Predicated region
    $region22: #{tpu_custom_call.1} parent=1 // pred_check
      _
    $region23: #{tpu_custom_call.1} parent=1 // pred_check_branch
      %63 = sbr.rel (0) target = $region25
    $region24: #{tpu_custom_call.1} parent=1 // pred_region
      %64 = dma.done [#allocation6], 16
    $region25: #{tpu_custom_call.1} parent=1 // pred_fallthru
      _
    // Predicated region
    $region26: #{tpu_custom_call.1} parent=1 // pred_check
      _
    $region27: #{tpu_custom_call.1} parent=1 // pred_check_branch
      %66 = sbr.rel (0) target = $region29
    $region28: #{tpu_custom_call.1} parent=1 // pred_region
      %67 = dma.done [#allocation6], 512
    $region29: #{tpu_custom_call.1} parent=1 // pred_fallthru
      _
    // Predicated region
    $region30: #{tpu_custom_call.1} parent=1 // pred_check
      _
    $region31: #{tpu_custom_call.1} parent=1 // pred_check_branch
      %69 = sbr.rel (0) target = $region33
    $region32: #{tpu_custom_call.1} parent=1 // pred_region
      %70 = dma.done [#allocation9], 256
    $region33: #{tpu_custom_call.1} parent=1 // pred_fallthru
      _
    %v71 = vld [vmem:[#allocation2] sm:$0xff]
    %v72 = vld [vmem:[#allocation2 + $0x8] sm:$0xff]
    %v73 = vmul.f32 %v71, %v71
    %v74 = vmul.f32 %v72, %v72
    %vm75 = vcmask 261120
    %v76 = vsel %vm75, %v73, 0.0
    %77 = vadd.xlane.f32.xlu0 %v76
    %v78 = vpop.xlane.xlu0 %77
    %v79 = vsel %vm75, %v74, 0.0
    %80 = vadd.xlane.f32.xlu0 %v79
    %v81 = vpop.xlane.xlu0 %80
    %v82 = vrcp.pop 32.0
    %v83 = vmul.f32 %v78, %v82
    %v84 = vmul.f32 %v81, %v82
    %v85 = vld [vmem:[#allocation5] sm:$0x1]
    %v86 = vadd.f32 %v83, 1e-06
    %v87 = vadd.f32 %v84, 1e-06
    %v88 = vrsqrt.pop %v86
    %v89 = vrsqrt.pop %v87
    %v91 = vlaneseq
    %v92 = vshrl.u32 %v91, 7
    %v93 = vsub.s32 0, %v92
    %v94 = vrot.slane %v85, %v93
    %v96 = vmul.f32 %v94, %v88
    %v97 = vmul.f32 %v94, %v89
    %v98 = vmul.f32 %v71, %v96
    %v99 = vmul.f32 %v72, %v97
    %v100 = vld [vmem:[#allocation7] sm:$0xff]
    %v101 = vld [vmem:[#allocation7 + $0x8] sm:$0xff]
    %v102 = vld [vmem:[#allocation7 + $0x10] sm:$0xff]
    %v103 = vld [vmem:[#allocation7 + $0x18] sm:$0xff]
    %v105 = vsel %vm75, %v98, 0
    %v108 = vsel %vm75, %v99, 0
    %110 = vmatprep.subr.mxu0 0.0
    %111 = vmatpush1.msra.mxu0 %v100
    %112 = vmatprep.subr.mxu0 0.0
    %113 = vmatpush1.msra.mxu0 %v101
    %114 = vmatprep.subr.mxu0 0.0
    %115 = vmatpush1.msra.mxu0 %v102
    %116 = vmatprep.subr.mxu0 0.0
    %117 = vmatpush1.msra.mxu0 %v103
    %118 = vmatprep.subr.mxu0 0.0
    %119 = vmatpush1.msra.mxu0 0.0
    %120 = vmatprep.subr.mxu0 0.0
    %121 = vmatpush1.msra.mxu0 0.0
    %122 = vmatprep.subr.mxu0 0.0
    %123 = vmatpush1.msra.mxu0 0.0
    %124 = vmatprep.subr.mxu0 0.0
    %125 = vmatpush1.msra.mxu0 0.0
    %126 = vmatprep.subr.mxu0 0.0
    %127 = vmatpush1.msra.mxu0 0.0
    %128 = vmatprep.subr.mxu0 0.0
    %129 = vmatpush1.msra.mxu0 0.0
    %130 = vmatprep.subr.mxu0 0.0
    %131 = vmatpush1.msra.mxu0 0.0
    %132 = vmatprep.subr.mxu0 0.0
    %133 = vmatpush1.msra.mxu0 0.0
    %134 = vmatprep.subr.mxu0 0.0
    %135 = vmatpush1.msra.mxu0 0.0
    %136 = vmatprep.subr.mxu0 0.0
    %137 = vmatpush1.msra.mxu0 0.0
    %138 = vmatprep.subr.mxu0 0.0
    %139 = vmatpush1.msra.mxu0 0.0
    %140 = vmatprep.subr.mxu0 0.0
    %141 = vmatpush1.msra.mxu0 0.0
    %142 = vmatprep.subr.mxu0 0.0
    %143 = vmatpush1.msra.mxu0 0.0
    %144 = vmatprep.subr.mxu0 0.0
    %145 = vmatpush1.msra.mxu0 0.0
    %146 = vmatprep.subr.mxu0 0.0
    %147 = vmatpush1.msra.mxu0 0.0
    %148 = vmatprep.subr.mxu0 0.0
    %149 = vmatpush1.msra.mxu0 0.0
    %150 = vmatprep.subr.mxu0 0.0
    %151 = vmatpush1.msra.mxu0 0.0
    %152 = vmatprep.subr.mxu0 0.0
    %153 = vmatpush1.msra.mxu0 0.0
    %154 = vmatprep.subr.mxu0 0.0
    %155 = vmatpush1.msra.mxu0 0.0
    %156 = vmatprep.subr.mxu0 0.0
    %157 = vmatpush1.msra.mxu0 0.0
    %158 = vmatprep.subr.mxu0 0.0
    %159 = vmatpush1.msra.mxu0 0.0
    %160 = vmatprep.subr.mxu0 0.0
    %161 = vmatpush1.msra.mxu0 0.0
    %162 = vmatprep.subr.mxu0 0.0
    %163 = vmatpush1.msra.mxu0 0.0
    %164 = vmatprep.subr.mxu0 0.0
    %165 = vmatpush1.msra.mxu0 0.0
    %166 = vmatprep.subr.mxu0 0.0
    %167 = vmatpush1.msra.mxu0 0.0
    %168 = vmatprep.subr.mxu0 0.0
    %169 = vmatpush1.msra.mxu0 0.0
    %170 = vmatprep.subr.mxu0 0.0
    %171 = vmatpush1.msra.mxu0 0.0
    %172 = vmatprep.subr.mxu0 0.0
    %173 = vmatpush1.msra.mxu0 0.0
    %174 = vmatprep.mubr.f32.mxu0 0.0
    %175 = vmatmul.mubr.f32.gmra.mrb[0].mxu0 %v105
    %v176 = vpop.f32.mrb[0].mxu0
    %v177 = vadd.f32 0.0, %v176
    %v178 = vpop.f32.mrb[0].mxu0
    %179 = vmatprep.mubr.f32.mxu0 0.0
    %180 = vmatmul.mubr.f32.gmra.mrb[0].mxu0 %v108
    %v181 = vpop.f32.mrb[0].mxu0
    %v182 = vadd.f32 0.0, %v181
    %v183 = vpop.f32.mrb[0].mxu0
    %184 = vdwg.mxu0
    %v185 = vld [vmem:[#allocation8] sm:$0xff]
    %v186 = vld [vmem:[#allocation8 + $0x8] sm:$0xff]
    %v187 = vmax.f32 %v177, %v185
    %v188 = vmax.f32 %v182, %v186
    %v189 = vsub.f32 %v177, %v185
    %v190 = vsub.f32 %v182, %v186
    %vm191 = vcmp.ne.f32.partialorder %v189, %v189
    %vm192 = vcmp.ne.f32.partialorder %v190, %v190
    %v193 = vadd.f32 %v177, %v185
    %v194 = vadd.f32 %v182, %v186
    %v195 = vand.u32 2147483647, %v189
    %v196 = vand.u32 2147483647, %v190
    %v197 = vsub.f32 0.0, %v195
    %v198 = vsub.f32 0.0, %v196
    %v199 = vmul.f32 %v197, 1.442695
    %v200 = vpow.pop %v199
    %v201 = vmul.f32 %v198, 1.442695
    %v202 = vpow.pop %v201
    %v203 = vadd.f32 %v200, 1.0
    %v204 = vlog2.pop %v203
    %v205 = vmul.f32 %v204, 0.6931472
    %v206 = vmul.f32 -0.5, %v200
    %v207 = vadd.f32 %v206, 1.0
    %v208 = vmul.f32 %v207, %v200
    %v209 = vand.u32 2147483647, %v200
    %vm210 = vcmp.lt.f32.partialorder %v209, 0.0004427343
    %v211 = vsel %vm210, %v208, %v205
    %v212 = vadd.f32 %v202, 1.0
    %v213 = vlog2.pop %v212
    %v214 = vmul.f32 %v213, 0.6931472
    %v215 = vmul.f32 -0.5, %v202
    %v216 = vadd.f32 %v215, 1.0
    %v217 = vmul.f32 %v216, %v202
    %v218 = vand.u32 2147483647, %v202
    %vm219 = vcmp.lt.f32.partialorder %v218, 0.0004427343
    %v220 = vsel %vm219, %v217, %v214
    %v221 = vadd.f32 %v187, %v211
    %v222 = vadd.f32 %v188, %v220
    %v223 = vsel %vm191, %v193, %v221
    %v224 = vsel %vm192, %v194, %v222
    %225 = vst [vmem:[#allocation10] sm:$0xff] %v223
    %226 = vst [vmem:[#allocation10 + $0x8] sm:$0xff] %v224
    // Predicated region
    $region34: #{tpu_custom_call.1} parent=1 // pred_check
      _
    $region35: #{tpu_custom_call.1} parent=1 // pred_check_branch
      %228 = sbr.rel (0) target = $region37
    $region36: #{tpu_custom_call.1} parent=1 // pred_region
      %s230 = ssub.s32 256, 256
      %231 = vsyncadd [#allocation4], %s230
      %s232 = sshll.u32 [#allocation10], 4
      %s233 = int_to_ptr.vmem [resolvable:$true] %s232
      %238 = dma.vmem_to_hbm [thread:$0]  %s233, 256, %s4, [#allocation4], 128, 128, 8
    $region37: #{tpu_custom_call.1} parent=1 // pred_fallthru
      _
    // Predicated region
    $region38: #{tpu_custom_call.1} parent=1 // pred_check
      _
    $region39: #{tpu_custom_call.1} parent=1 // pred_check_branch
      %240 = sbr.rel (0) target = $region41
    $region40: #{tpu_custom_call.1} parent=1 // pred_region
      %241 = dma.done [#allocation4], 256
    $region41: #{tpu_custom_call.1} parent=1 // pred_fallthru
      _
    %242 = vsyncpa [#allocation3], 1
    %243 = vsyncpa [#allocation6], 1
    %244 = vsyncpa [#allocation9], 1
    %245 = vsyncpa [#allocation4], 1

</llo_original>
